<compile_context>
chip_gen: v7x
topology: tpu7x:2x2x1
jax: 0.10.0
libtpu: 0.0.40
codegen_flags: <defaults>
</compile_context>

<pallas_src>
import functools
import math

import jax
import jax.numpy as jnp
from jax.experimental import pallas as pl
from jax.experimental.pallas import tpu as pltpu


MASK_VALUE = -1e30  # finite "minus infinity" -> exp() underflows to exactly 0


# --------------------------------------------------------------------------
# Rotary embedding (matches the PyTorch apply_rotary_emb exactly).
# Pure elementwise / negligible cost -> kept in the wrapper.
# --------------------------------------------------------------------------
def apply_rotary_emb(x: jax.Array, freqs_cis: jax.Array) -> jax.Array:
    # x: (bsz, seq, n_head, head_dim), freqs_cis: (seq, head_dim//2, 2)
    xs = x.astype(jnp.float32).reshape(*x.shape[:-1], -1, 2)
    fc = freqs_cis.reshape(1, xs.shape[1], 1, xs.shape[3], 2)
    x0, x1 = xs[..., 0], xs[..., 1]
    f0, f1 = fc[..., 0], fc[..., 1]
    out = jnp.stack([x0 * f0 - x1 * f1, x1 * f0 + x0 * f1], axis=-1)
    return out.reshape(x.shape).astype(x.dtype)


# --------------------------------------------------------------------------
# Bias-free linear layer as a Pallas matmul kernel.
# Demo shapes are tiny, so a single full-array block (one MXU call, one DMA
# each way) is optimal; a production version would tile (M, N, K).
# --------------------------------------------------------------------------
def _matmul_kernel(x_ref, w_ref, o_ref):
    o_ref[...] = jnp.dot(
        x_ref[...], w_ref[...], preferred_element_type=jnp.float32
    ).astype(o_ref.dtype)


def linear_no_bias(x2d: jax.Array, w: jax.Array) -> jax.Array:
    M, K = x2d.shape
    K2, N = w.shape
    assert K == K2
    return pl.pallas_call(
        _matmul_kernel,
        out_shape=jax.ShapeDtypeStruct((M, N), x2d.dtype),
        grid_spec=pl.GridSpec(
            grid=(1,),
            in_specs=[
                pl.BlockSpec((M, K), lambda i: (0, 0)),
                pl.BlockSpec((K, N), lambda i: (0, 0)),
            ],
            out_specs=pl.BlockSpec((M, N), lambda i: (0, 0)),
        ),
    )(x2d, w)


# --------------------------------------------------------------------------
# Causal flash attention kernel (online softmax), one (batch*head) per
# leading grid axis, q blocks parallel, kv blocks = reduction axis.
# --------------------------------------------------------------------------
def _flash_attn_kernel(q_ref, k_ref, v_ref, o_ref, m_sc, l_sc, acc_sc,
                       *, sm_scale, block_q, block_k):
    q_i = pl.program_id(1)
    kv_i = pl.program_id(2)

    @pl.when(kv_i == 0)
    def _():
        m_sc[...] = jnp.full_like(m_sc, MASK_VALUE)
        l_sc[...] = jnp.zeros_like(l_sc)
        acc_sc[...] = jnp.zeros_like(acc_sc)

    q_start = q_i * block_q
    kv_start = kv_i * block_k

    # Causal: skip kv blocks that lie entirely above the diagonal.
    @pl.when(kv_start <= q_start + block_q - 1)
    def _():
        q = q_ref[0].astype(jnp.float32)        # (block_q, head_dim)
        k = k_ref[0].astype(jnp.float32)        # (block_k, head_dim)
        v = v_ref[0].astype(jnp.float32)        # (block_k, head_dim)

        s = jnp.dot(q, k.T, preferred_element_type=jnp.float32) * sm_scale
        row = q_start + jax.lax.broadcasted_iota(jnp.int32, s.shape, 0)
        col = kv_start + jax.lax.broadcasted_iota(jnp.int32, s.shape, 1)
        s = jnp.where(col <= row, s, MASK_VALUE)

        m_prev = m_sc[...]
        m_new = jnp.maximum(m_prev, s.max(axis=-1, keepdims=True))
        alpha = jnp.exp(m_prev - m_new)
        p = jnp.exp(s - m_new)
        l_sc[...] = alpha * l_sc[...] + p.sum(axis=-1, keepdims=True)
        acc_sc[...] = alpha * acc_sc[...] + jnp.dot(
            p, v, preferred_element_type=jnp.float32)
        m_sc[...] = m_new

    @pl.when(kv_i == pl.num_programs(2) - 1)
    def _():
        o_ref[0] = (acc_sc[...] *
                    pl.reciprocal(l_sc[...], approx=False)).astype(o_ref.dtype)


def flash_attention(q, k, v, *, sm_scale, block_q=128, block_k=128):
    """q, k, v: (batch*heads, seq, head_dim); causal attention."""
    BH, S, D = q.shape
    block_q = min(block_q, S)
    block_k = min(block_k, S)
    assert S % block_q == 0 and S % block_k == 0, "seq must be a multiple of block"

    kernel = functools.partial(
        _flash_attn_kernel, sm_scale=sm_scale, block_q=block_q, block_k=block_k)

    return pl.pallas_call(
        kernel,
        out_shape=jax.ShapeDtypeStruct((BH, S, D), q.dtype),
        grid_spec=pltpu.PrefetchScalarGridSpec(
            num_scalar_prefetch=0,
            grid=(BH, S // block_q, S // block_k),
            in_specs=[
                pl.BlockSpec((1, block_q, D), lambda b, qi, ki: (b, qi, 0)),
                pl.BlockSpec((1, block_k, D), lambda b, qi, ki: (b, ki, 0)),
                pl.BlockSpec((1, block_k, D), lambda b, qi, ki: (b, ki, 0)),
            ],
            out_specs=pl.BlockSpec((1, block_q, D), lambda b, qi, ki: (b, qi, 0)),
            scratch_shapes=[
                pltpu.VMEM((block_q, 1), jnp.float32),   # running max m_i
                pltpu.VMEM((block_q, 1), jnp.float32),   # running denom l_i
                pltpu.VMEM((block_q, D), jnp.float32),   # output accumulator
            ],
        ),
        compiler_params=pltpu.CompilerParams(
            dimension_semantics=("parallel", "parallel", "arbitrary")),
    )(q, k, v)


# --------------------------------------------------------------------------
# JAX/Pallas mirror of the PyTorch Attention module (eval, no kv_cache).
# --------------------------------------------------------------------------
class Attention:
    def __init__(self, dim, n_head, n_kv_head, key, dtype=jnp.float32):
        assert dim % n_head == 0
        self.dim = dim
        self.n_head = n_head
        self.n_kv_head = n_kv_head
        self.head_dim = dim // n_head
        total_kv_dim = (n_head + 2 * n_kv_head) * self.head_dim
        k1, k2 = jax.random.split(key)
        # Stored as (in, out) so the layer computes x @ W (same math as
        # nn.Linear's x @ W.T with W of shape (out, in)).
        self.wqkv = 0.02 * jax.random.normal(k1, (dim, total_kv_dim), dtype)
        self.wo = 0.02 * jax.random.normal(k2, (dim, dim), dtype)

    def __call__(self, x, freqs_cis):
        bsz, seqlen, _ = x.shape
        hd = self.head_dim
        kv_size = self.n_kv_head * hd

        # QKV projection (Pallas matmul).
        qkv = linear_no_bias(x.reshape(bsz * seqlen, self.dim), self.wqkv)
        qkv = qkv.reshape(bsz, seqlen, -1)
        xq = qkv[..., : self.dim].reshape(bsz, seqlen, self.n_head, hd)
        xk = qkv[..., self.dim: self.dim + kv_size].reshape(
            bsz, seqlen, self.n_kv_head, hd)
        xv = qkv[..., self.dim + kv_size:].reshape(
            bsz, seqlen, self.n_kv_head, hd)

        xq = apply_rotary_emb(xq, freqs_cis)
        xk = apply_rotary_emb(xk, freqs_cis)

        # (bsz, heads, seq, head_dim)
        xq = xq.transpose(0, 2, 1, 3)
        xk = xk.transpose(0, 2, 1, 3)
        xv = xv.transpose(0, 2, 1, 3)

        # GQA: repeat_interleave kv heads up to n_head.
        n_rep = self.n_head // self.n_kv_head
        keys = jnp.repeat(xk, n_rep, axis=1)
        values = jnp.repeat(xv, n_rep, axis=1)

        q = xq.reshape(bsz * self.n_head, seqlen, hd)
        k = keys.reshape(bsz * self.n_head, seqlen, hd)
        v = values.reshape(bsz * self.n_head, seqlen, hd)

        block = 128 if seqlen % 128 == 0 else 8
        o = flash_attention(q, k, v, sm_scale=1.0 / math.sqrt(hd),
                            block_q=block, block_k=block)

        o = o.reshape(bsz, self.n_head, seqlen, hd).transpose(0, 2, 1, 3)
        out = linear_no_bias(o.reshape(bsz * seqlen, self.dim), self.wo)
        # attn_dropout / resid_dropout: identity in eval mode.
        return out.reshape(bsz, seqlen, self.dim)


# --------------------------------------------------------------------------
# Pure-JAX reference for correctness checking.
# --------------------------------------------------------------------------
def reference_attention(x, freqs_cis, wqkv, wo, n_head, n_kv_head):
    bsz, seqlen, dim = x.shape
    hd = dim // n_head
    kv_size = n_kv_head * hd
    hp = jax.lax.Precision.HIGHEST

    qkv = jnp.einsum("bsd,de->bse", x, wqkv, precision=hp)
    xq = qkv[..., :dim].reshape(bsz, seqlen, n_head, hd)
    xk = qkv[..., dim:dim + kv_size].reshape(bsz, seqlen, n_kv_head, hd)
    xv = qkv[..., dim + kv_size:].reshape(bsz, seqlen, n_kv_head, hd)
    xq = apply_rotary_emb(xq, freqs_cis)
    xk = apply_rotary_emb(xk, freqs_cis)
    xq, xk, xv = (t.transpose(0, 2, 1, 3) for t in (xq, xk, xv))
    n_rep = n_head // n_kv_head
    keys = jnp.repeat(xk, n_rep, axis=1)
    values = jnp.repeat(xv, n_rep, axis=1)
    s = jnp.einsum("bhqd,bhkd->bhqk", xq, keys, precision=hp) / math.sqrt(hd)
    causal = jnp.tril(jnp.ones((seqlen, seqlen), dtype=bool))
    s = jnp.where(causal, s, -jnp.inf)
    p = jax.nn.softmax(s, axis=-1)
    o = jnp.einsum("bhqk,bhkd->bhqd", p, values, precision=hp)
    o = o.transpose(0, 2, 1, 3).reshape(bsz, seqlen, dim)
    return jnp.einsum("bsd,de->bse", o, wo, precision=hp)


if __name__ == "__main__":
    key = jax.random.PRNGKey(0)
    kx, kw = jax.random.split(key)

    bsz, seqlen = 2, 16
    dim, n_head, n_kv_head = 128, 4, 2           # head_dim = 32, GQA 2:1
    head_dim = dim // n_head

    attn = Attention(dim, n_head, n_kv_head, kw)
    x = jax.random.normal(kx, (bsz, seqlen, dim), jnp.float32)

    # freqs_cis: (seq, head_dim//2, 2) = (cos, sin) pairs (RoPE base 10000)
    pos = jnp.arange(seqlen, dtype=jnp.float32)[:, None]
    inv_freq = 1.0 / (10000.0 ** (
        jnp.arange(0, head_dim, 2, dtype=jnp.float32) / head_dim))
    angles = pos * inv_freq[None, :]
    freqs_cis = jnp.stack([jnp.cos(angles), jnp.sin(angles)], axis=-1)

    out = jax.block_until_ready(attn(x, freqs_cis))

    ref = reference_attention(x, freqs_cis, attn.wqkv, attn.wo,
                              n_head, n_kv_head)
    assert out.shape == (bsz, seqlen, dim), out.shape
    max_err = float(jnp.max(jnp.abs(out - ref)))
    assert jnp.allclose(out, ref, atol=1e-3, rtol=1e-3), f"max_err={max_err}"

    print("KERNEL_OK")
</pallas_src>

<mosaic_0001>
module attributes {stable_mosaic.version = 11 : i64} {
  func.func @_matmul_kernel(%arg0: i32, %arg1: memref<32x128xf32, #tpu.memory_space<vmem>>, %arg2: memref<128x256xf32, #tpu.memory_space<vmem>>, %arg3: memref<32x256xf32, #tpu.memory_space<vmem>>) attributes {dimension_semantics = [#tpu.dimension_semantics<arbitrary>], iteration_bounds = array<i64: 1>, scalar_prefetch = 0 : i64, scratch_operands = 0 : i64, tpu.core_type = #tpu.core_type<tc>, window_params = [{pipeline_mode = #tpu.pipeline_mode<synchronous>, transform_indices = @transform_0, window_bounds = array<i64: 32, 128>}, {pipeline_mode = #tpu.pipeline_mode<synchronous>, transform_indices = @transform_1, window_bounds = array<i64: 128, 256>}, {pipeline_mode = #tpu.pipeline_mode<synchronous>, transform_indices = @transform_2, window_bounds = array<i64: 32, 256>}]} {
    %c0 = arith.constant 0 : index
    %c0_0 = arith.constant 0 : index
    %0 = vector.load %arg1[%c0, %c0_0] : memref<32x128xf32, #tpu.memory_space<vmem>>, vector<32x128xf32>
    %c0_1 = arith.constant 0 : index
    %c0_2 = arith.constant 0 : index
    %1 = vector.load %arg2[%c0_1, %c0_2] : memref<128x256xf32, #tpu.memory_space<vmem>>, vector<128x256xf32>
    %cst = arith.constant dense<0.000000e+00> : vector<32x256xf32>
    %2 = tpu.matmul %0, %1, %cst {dimension_numbers = #tpu.dot_dimension_numbers<[1], [0], [0], [1], [0, 0, 1, 1], [], []>} : vector<32x128xf32>, vector<128x256xf32>, vector<32x256xf32> -> vector<32x256xf32>
    %c0_3 = arith.constant 0 : index
    %c0_4 = arith.constant 0 : index
    %3 = vector.load %arg3[%c0_3, %c0_4] : memref<32x256xf32, #tpu.memory_space<vmem>>, vector<32x256xf32>
    tpu.vector_store %arg3[%c0_3, %c0_4], %2 {strides = array<i32>} : memref<32x256xf32, #tpu.memory_space<vmem>>, vector<32x256xf32>,
    return
  }
  func.func @transform_0(%arg0: i32) -> (i32, i32) {
    %c0_i32 = arith.constant 0 : i32
    %c0_i32_0 = arith.constant 0 : i32
    %c0_i32_1 = arith.constant 0 : i32
    return %c0_i32, %c0_i32_0 : i32, i32
  }
  func.func @transform_1(%arg0: i32) -> (i32, i32) {
    %c0_i32 = arith.constant 0 : i32
    %c0_i32_0 = arith.constant 0 : i32
    %c0_i32_1 = arith.constant 0 : i32
    return %c0_i32, %c0_i32_0 : i32, i32
  }
  func.func @transform_2(%arg0: i32) -> (i32, i32) {
    %c0_i32 = arith.constant 0 : i32
    %c0_i32_0 = arith.constant 0 : i32
    %c0_i32_1 = arith.constant 0 : i32
    return %c0_i32, %c0_i32_0 : i32, i32
  }
}

</mosaic_0001>

<llo_original>
// kernel: tpu_custom_call.1
$region0: #{tpu_custom_call.1}
  #allocation0 [shape = 'u32[]', space=smem, size = 0x4, offset = 0x4, fixed_abs, tag = 'smem constant byte address 0x4 - core index']
  #allocation1 [shape = 'u32[144,128]{1,0:T(1,128)}', space=vmem, size = 0x12000, scoped, tag = 'internal scratch']
  %s0 = inlined_call_operand.hbm [shape: f32[32,128], index: 0, kind: input, shape index: {}]
  %s1 = inlined_call_operand.hbm [shape: f32[128,256], index: 1, kind: input, shape index: {}]
  %s2 = inlined_call_operand.hbm [shape: f32[32,256], index: 2, kind: output, shape index: {}]
  %s3 = sld [smem:[#allocation0]]
  $region26: #{tpu_custom_call.1} parent=0
    _
  %s5 = ssub.s32 1, %s3
  %s6 = scalar_select 0, %s5, %s3
  $region1: #{tpu_custom_call.1} parent=0
    #allocation2 [shape = 'u8[16384]{0}', space=vmem, size = 0x4000, scoped, tag = 'input window, operand 0, single buffered']
    #allocation3 [shape = 's32[1]{0}', space=sflag, size = 0x4, scoped, tag = 'scoped memory for tpu_custom_call.1']
    #allocation4 [shape = 's32[1]{0}', space=sflag, size = 0x4, scoped, tag = 'scoped memory for tpu_custom_call.1']
    #allocation5 [shape = 'u8[131072]{0}', space=vmem, size = 0x20000, scoped, tag = 'input window, operand 1, single buffered']
    #allocation6 [shape = 's32[1]{0}', space=sflag, size = 0x4, scoped, tag = 'scoped memory for tpu_custom_call.1']
    #allocation7 [shape = 'u8[32768]{0}', space=vmem, size = 0x8000, scoped, tag = 'output window, operand 0, single buffered']
    %7 = vsyncpa [#allocation3], 0
    %8 = vsyncpa [#allocation6], 0
    %9 = vsyncpa [#allocation4], 0
    // Predicated region
    $region2: #{tpu_custom_call.1} parent=1 // pred_check
      _
    $region3: #{tpu_custom_call.1} parent=1 // pred_check_branch
      %11 = sbr.rel (0) target = $region5
    $region4: #{tpu_custom_call.1} parent=1 // pred_region
      %s13 = ssub.s32 512, 512
      %14 = vsyncadd [#allocation3], %s13
      %s15 = sshll.u32 [#allocation2], 4
      %s16 = int_to_ptr.vmem [resolvable:$true] %s15
      %21 = dma.hbm_to_vmem [thread:$0]  %s0, 512, %s16, [#allocation3], 128, 128, 8
    $region5: #{tpu_custom_call.1} parent=1 // pred_fallthru
      _
    // Predicated region
    $region6: #{tpu_custom_call.1} parent=1 // pred_check
      _
    $region7: #{tpu_custom_call.1} parent=1 // pred_check_branch
      %23 = sbr.rel (0) target = $region9
    $region8: #{tpu_custom_call.1} parent=1 // pred_region
      %s25 = ssub.s32 4096, 4096
      %26 = vsyncadd [#allocation6], %s25
      %s27 = sshll.u32 [#allocation5], 4
      %s28 = int_to_ptr.vmem [resolvable:$true] %s27
      %33 = dma.hbm_to_vmem [thread:$0]  %s1, 4096, %s28, [#allocation6], 256, 256, 16
    $region9: #{tpu_custom_call.1} parent=1 // pred_fallthru
      _
    // Predicated region
    $region10: #{tpu_custom_call.1} parent=1 // pred_check
      _
    $region11: #{tpu_custom_call.1} parent=1 // pred_check_branch
      %35 = sbr.rel (0) target = $region13
    $region12: #{tpu_custom_call.1} parent=1 // pred_region
      %36 = dma.done [#allocation3], 512
    $region13: #{tpu_custom_call.1} parent=1 // pred_fallthru
      _
    // Predicated region
    $region14: #{tpu_custom_call.1} parent=1 // pred_check
      _
    $region15: #{tpu_custom_call.1} parent=1 // pred_check_branch
      %38 = sbr.rel (0) target = $region17
    $region16: #{tpu_custom_call.1} parent=1 // pred_region
      %39 = dma.done [#allocation6], 4096
    $region17: #{tpu_custom_call.1} parent=1 // pred_fallthru
      _
    %v40 = vld [vmem:[#allocation2] sm:$0xff]
    %v41 = vld [vmem:[#allocation2 + $0x8] sm:$0xff]
    %v42 = vld [vmem:[#allocation2 + $0x10] sm:$0xff]
    %v43 = vld [vmem:[#allocation2 + $0x18] sm:$0xff]
    %v44 = vld [vmem:[#allocation5] sm:$0xff]
    %v45 = vld [vmem:[#allocation5 + $0x8] sm:$0xff]
    %v46 = vld [vmem:[#allocation5 + $0x10] sm:$0xff]
    %v47 = vld [vmem:[#allocation5 + $0x18] sm:$0xff]
    %v48 = vld [vmem:[#allocation5 + $0x20] sm:$0xff]
    %v49 = vld [vmem:[#allocation5 + $0x28] sm:$0xff]
    %v50 = vld [vmem:[#allocation5 + $0x30] sm:$0xff]
    %v51 = vld [vmem:[#allocation5 + $0x38] sm:$0xff]
    %v52 = vld [vmem:[#allocation5 + $0x40] sm:$0xff]
    %v53 = vld [vmem:[#allocation5 + $0x48] sm:$0xff]
    %v54 = vld [vmem:[#allocation5 + $0x50] sm:$0xff]
    %v55 = vld [vmem:[#allocation5 + $0x58] sm:$0xff]
    %v56 = vld [vmem:[#allocation5 + $0x60] sm:$0xff]
    %v57 = vld [vmem:[#allocation5 + $0x68] sm:$0xff]
    %v58 = vld [vmem:[#allocation5 + $0x70] sm:$0xff]
    %v59 = vld [vmem:[#allocation5 + $0x78] sm:$0xff]
    %v60 = vld [vmem:[#allocation5 + $0x80] sm:$0xff]
    %v61 = vld [vmem:[#allocation5 + $0x88] sm:$0xff]
    %v62 = vld [vmem:[#allocation5 + $0x90] sm:$0xff]
    %v63 = vld [vmem:[#allocation5 + $0x98] sm:$0xff]
    %v64 = vld [vmem:[#allocation5 + $0xa0] sm:$0xff]
    %v65 = vld [vmem:[#allocation5 + $0xa8] sm:$0xff]
    %v66 = vld [vmem:[#allocation5 + $0xb0] sm:$0xff]
    %v67 = vld [vmem:[#allocation5 + $0xb8] sm:$0xff]
    %v68 = vld [vmem:[#allocation5 + $0xc0] sm:$0xff]
    %v69 = vld [vmem:[#allocation5 + $0xc8] sm:$0xff]
    %v70 = vld [vmem:[#allocation5 + $0xd0] sm:$0xff]
    %v71 = vld [vmem:[#allocation5 + $0xd8] sm:$0xff]
    %v72 = vld [vmem:[#allocation5 + $0xe0] sm:$0xff]
    %v73 = vld [vmem:[#allocation5 + $0xe8] sm:$0xff]
    %v74 = vld [vmem:[#allocation5 + $0xf0] sm:$0xff]
    %v75 = vld [vmem:[#allocation5 + $0xf8] sm:$0xff]
    %76 = vmatprep.subr.mxu0 %v45
    %77 = vmatpush1.msra.mxu0 %v44
    %78 = vmatprep.subr.mxu0 %v47
    %79 = vmatpush1.msra.mxu0 %v46
    %80 = vmatprep.subr.mxu0 %v49
    %81 = vmatpush1.msra.mxu0 %v48
    %82 = vmatprep.subr.mxu0 %v51
    %83 = vmatpush1.msra.mxu0 %v50
    %84 = vmatprep.subr.mxu0 %v53
    %85 = vmatpush1.msra.mxu0 %v52
    %86 = vmatprep.subr.mxu0 %v55
    %87 = vmatpush1.msra.mxu0 %v54
    %88 = vmatprep.subr.mxu0 %v57
    %89 = vmatpush1.msra.mxu0 %v56
    %90 = vmatprep.subr.mxu0 %v59
    %91 = vmatpush1.msra.mxu0 %v58
    %92 = vmatprep.subr.mxu0 %v61
    %93 = vmatpush1.msra.mxu0 %v60
    %94 = vmatprep.subr.mxu0 %v63
    %95 = vmatpush1.msra.mxu0 %v62
    %96 = vmatprep.subr.mxu0 %v65
    %97 = vmatpush1.msra.mxu0 %v64
    %98 = vmatprep.subr.mxu0 %v67
    %99 = vmatpush1.msra.mxu0 %v66
    %100 = vmatprep.subr.mxu0 %v69
    %101 = vmatpush1.msra.mxu0 %v68
    %102 = vmatprep.subr.mxu0 %v71
    %103 = vmatpush1.msra.mxu0 %v70
    %104 = vmatprep.subr.mxu0 %v73
    %105 = vmatpush1.msra.mxu0 %v72
    %106 = vmatprep.subr.mxu0 %v75
    %107 = vmatpush1.msra.mxu0 %v74
    %108 = vmatprep.subr.mxu0 0.0
    %109 = vmatpush1.msra.mxu0 0.0
    %110 = vmatprep.subr.mxu0 0.0
    %111 = vmatpush1.msra.mxu0 0.0
    %112 = vmatprep.subr.mxu0 0.0
    %113 = vmatpush1.msra.mxu0 0.0
    %114 = vmatprep.subr.mxu0 0.0
    %115 = vmatpush1.msra.mxu0 0.0
    %116 = vmatprep.subr.mxu0 0.0
    %117 = vmatpush1.msra.mxu0 0.0
    %118 = vmatprep.subr.mxu0 0.0
    %119 = vmatpush1.msra.mxu0 0.0
    %120 = vmatprep.subr.mxu0 0.0
    %121 = vmatpush1.msra.mxu0 0.0
    %122 = vmatprep.subr.mxu0 0.0
    %123 = vmatpush1.msra.mxu0 0.0
    %124 = vmatprep.subr.mxu0 0.0
    %125 = vmatpush1.msra.mxu0 0.0
    %126 = vmatprep.subr.mxu0 0.0
    %127 = vmatpush1.msra.mxu0 0.0
    %128 = vmatprep.subr.mxu0 0.0
    %129 = vmatpush1.msra.mxu0 0.0
    %130 = vmatprep.subr.mxu0 0.0
    %131 = vmatpush1.msra.mxu0 0.0
    %132 = vmatprep.subr.mxu0 0.0
    %133 = vmatpush1.msra.mxu0 0.0
    %134 = vmatprep.subr.mxu0 0.0
    %135 = vmatpush1.msra.mxu0 0.0
    %136 = vmatprep.subr.mxu0 0.0
    %137 = vmatpush1.msra.mxu0 0.0
    %138 = vmatprep.subr.mxu0 0.0
    %139 = vmatpush1.msra.mxu0 0.0
    %140 = vmatprep.mubr.f32.mxu0 0.0
    %141 = vmatmul.mubr.f32.gmra.mrb[0].mxu0 %v40
    %v142 = vpop.f32.mrb[0].mxu0
    %v143 = vadd.f32 0.0, %v142
    %v144 = vpop.f32.mrb[0].mxu0
    %v145 = vadd.f32 0.0, %v144
    %146 = vmatprep.mubr.f32.mxu0 0.0
    %147 = vmatmul.mubr.f32.gmra.mrb[0].mxu0 %v41
    %v148 = vpop.f32.mrb[0].mxu0
    %v149 = vadd.f32 0.0, %v148
    %v150 = vpop.f32.mrb[0].mxu0
    %v151 = vadd.f32 0.0, %v150
    %152 = vmatprep.mubr.f32.mxu0 0.0
    %153 = vmatmul.mubr.f32.gmra.mrb[0].mxu0 %v42
    %v154 = vpop.f32.mrb[0].mxu0
    %v155 = vadd.f32 0.0, %v154
    %v156 = vpop.f32.mrb[0].mxu0
    %v157 = vadd.f32 0.0, %v156
    %158 = vmatprep.mubr.f32.mxu0 0.0
    %159 = vmatmul.mubr.f32.gmra.mrb[0].mxu0 %v43
    %v160 = vpop.f32.mrb[0].mxu0
    %v161 = vadd.f32 0.0, %v160
    %v162 = vpop.f32.mrb[0].mxu0
    %v163 = vadd.f32 0.0, %v162
    %164 = vdwg.mxu0
    %165 = vst [vmem:[#allocation7] sm:$0xff] %v143
    %166 = vst [vmem:[#allocation7 + $0x8] sm:$0xff] %v145
    %167 = vst [vmem:[#allocation7 + $0x10] sm:$0xff] %v149
    %168 = vst [vmem:[#allocation7 + $0x18] sm:$0xff] %v151
    %169 = vst [vmem:[#allocation7 + $0x20] sm:$0xff] %v155
    %170 = vst [vmem:[#allocation7 + $0x28] sm:$0xff] %v157
    %171 = vst [vmem:[#allocation7 + $0x30] sm:$0xff] %v161
    %172 = vst [vmem:[#allocation7 + $0x38] sm:$0xff] %v163
    // Predicated region
    $region18: #{tpu_custom_call.1} parent=1 // pred_check
      _
    $region19: #{tpu_custom_call.1} parent=1 // pred_check_branch
      %174 = sbr.rel (0) target = $region21
    $region20: #{tpu_custom_call.1} parent=1 // pred_region
      %s176 = ssub.s32 1024, 1024
      %177 = vsyncadd [#allocation4], %s176
      %s178 = sshll.u32 [#allocation7], 4
      %s179 = int_to_ptr.vmem [resolvable:$true] %s178
      %184 = dma.vmem_to_hbm [thread:$0]  %s179, 1024, %s2, [#allocation4], 256, 256, 16
    $region21: #{tpu_custom_call.1} parent=1 // pred_fallthru
      _
    // Predicated region
    $region22: #{tpu_custom_call.1} parent=1 // pred_check
      _
    $region23: #{tpu_custom_call.1} parent=1 // pred_check_branch
      %186 = sbr.rel (0) target = $region25
    $region24: #{tpu_custom_call.1} parent=1 // pred_region
      %187 = dma.done [#allocation4], 1024
    $region25: #{tpu_custom_call.1} parent=1 // pred_fallthru
      _
    %188 = vsyncpa [#allocation3], 1
    %189 = vsyncpa [#allocation6], 1
    %190 = vsyncpa [#allocation4], 1

</llo_original>
